<compile_context>
chip_gen: v5e
topology: v5e:2x2
jax: 0.10.0
libtpu: 0.0.40
codegen_flags: <defaults>
</compile_context>

<pallas_src>
import functools

import jax
import jax.numpy as jnp
from jax.experimental import pallas as pl
from jax.experimental.pallas import tpu as pltpu


def _round_up(x, m):
    return (x + m - 1) // m * m


def _tile(dim, target):
    """Largest lane-aligned (multiple-of-128) tile <= target dividing dim, or
    the full dim if it already fits / no aligned divisor exists."""
    if dim <= target:
        return dim
    t = (target // 128) * 128
    while t >= 128:
        if dim % t == 0:
            return t
        t -= 128
    return dim


# ----------------------------- kernel 1: fc1 + swiglu ------------------------

def _fc1_swiglu_kernel(x_ref, wg_ref, wu_ref, a1_ref, b1g_ref, b1u_ref, g_ref,
                       *, alpha):
    x = x_ref[...]                                              # (tm, D)
    # LoRA down-projection once per tile; alpha applied on the small (tm, r).
    la = (alpha * jnp.dot(x, a1_ref[...],
                          preferred_element_type=jnp.float32)
          ).astype(b1g_ref.dtype)                               # (tm, r)
    h_gate = (jnp.dot(x, wg_ref[...], preferred_element_type=jnp.float32)
              + jnp.dot(la, b1g_ref[...], preferred_element_type=jnp.float32))
    h_up = (jnp.dot(x, wu_ref[...], preferred_element_type=jnp.float32)
            + jnp.dot(la, b1u_ref[...], preferred_element_type=jnp.float32))
    # swiglu: silu(gate) * up, in f32; dropout == identity (eval mode).
    g_ref[...] = ((h_gate * jax.nn.sigmoid(h_gate)) * h_up).astype(g_ref.dtype)


# ----------------------------- kernel 2: fc2 (LoRA) --------------------------

def _fc2_kernel(g_ref, w2_ref, a2_ref, b2_ref, o_ref, acc_ref, lacc_ref,
                *, alpha):
    k = pl.program_id(2)

    @pl.when(k == 0)
    def _():
        acc_ref[...] = jnp.zeros_like(acc_ref)
        lacc_ref[...] = jnp.zeros_like(lacc_ref)

    g = g_ref[...]                                              # (tm, tk)
    acc_ref[...] += jnp.dot(g, w2_ref[...],
                            preferred_element_type=jnp.float32)
    lacc_ref[...] += jnp.dot(g, a2_ref[...],
                             preferred_element_type=jnp.float32)

    @pl.when(k == pl.num_programs(2) - 1)
    def _():
        lora = jnp.dot((alpha * lacc_ref[...]).astype(b2_ref.dtype),
                       b2_ref[...], preferred_element_type=jnp.float32)
        o_ref[...] = (acc_ref[...] + lora).astype(o_ref.dtype)


# --------------------------------- wrapper -----------------------------------

def feed_forward(x, params, *, alpha=1.0, tm=256, tn=512, tk=512,
                 compute_dtype=jnp.bfloat16,
                 vmem_limit_bytes=48 * 1024 * 1024):
    """x: (batch, seq, d_model); params: (w1, a1, b1, w2, a2, b2) stored (in, out)."""
    B, S, D = x.shape
    w1, a1, b1, w2, a2, b2 = params
    inter = w2.shape[0]
    rank = a1.shape[1]
    out_dtype = x.dtype
    cd = compute_dtype if compute_dtype is not None else x.dtype

    # Pre-split fc1 into gate/up halves (chunk(2, -1)) outside the kernel.
    wg, wu = w1[:, :inter], w1[:, inter:]
    b1g, b1u = b1[:, :inter], b1[:, inter:]

    wg, wu, a1c, b1g, b1u = (t.astype(cd) for t in (wg, wu, a1, b1g, b1u))
    w2c, a2c, b2c = (t.astype(cd) for t in (w2, a2, b2))

    M = B * S
    tm_ = min(tm, _round_up(M, 8))          # keep sublane alignment at small M
    Mp = _round_up(M, tm_)
    xf = x.reshape(M, D).astype(cd)
    if Mp != M:
        xf = jnp.pad(xf, ((0, Mp - M), (0, 0)))

    tn1 = _tile(inter, tn)                  # fc1 output-column tile (d_ff/2)
    tn2 = _tile(D, tn)                      # fc2 output-column tile (d_model)
    tk2 = _tile(inter, tk)                  # fc2 reduction tile

    # --- fc1 + swiglu ---------------------------------------------------------
    g = pl.pallas_call(
        functools.partial(_fc1_swiglu_kernel, alpha=alpha),
        out_shape=jax.ShapeDtypeStruct((Mp, inter), cd),
        grid_spec=pltpu.PrefetchScalarGridSpec(
            num_scalar_prefetch=0,
            grid=(Mp // tm_, inter // tn1),
            in_specs=[
                pl.BlockSpec((tm_, D), lambda i, j: (i, 0)),      # x tile
                pl.BlockSpec((D, tn1), lambda i, j: (0, j)),      # W1 gate cols
                pl.BlockSpec((D, tn1), lambda i, j: (0, j)),      # W1 up cols
                pl.BlockSpec((D, rank), lambda i, j: (0, 0)),     # lora A1
                pl.BlockSpec((rank, tn1), lambda i, j: (0, j)),   # lora B1 gate
                pl.BlockSpec((rank, tn1), lambda i, j: (0, j)),   # lora B1 up
            ],
            out_specs=pl.BlockSpec((tm_, tn1), lambda i, j: (i, j)),
        ),
        compiler_params=pltpu.CompilerParams(
            dimension_semantics=("parallel", "parallel"),
            vmem_limit_bytes=vmem_limit_bytes),
    )(xf, wg, wu, a1c, b1g, b1u)

    # --- fc2 (LoRA) with reduction over `inter` -------------------------------
    out = pl.pallas_call(
        functools.partial(_fc2_kernel, alpha=alpha),
        out_shape=jax.ShapeDtypeStruct((Mp, D), out_dtype),
        grid_spec=pltpu.PrefetchScalarGridSpec(
            num_scalar_prefetch=0,
            grid=(Mp // tm_, D // tn2, inter // tk2),
            in_specs=[
                pl.BlockSpec((tm_, tk2), lambda i, j, k: (i, k)),   # g tile
                pl.BlockSpec((tk2, tn2), lambda i, j, k: (k, j)),   # W2 tile
                pl.BlockSpec((tk2, rank), lambda i, j, k: (k, 0)),  # lora A2
                pl.BlockSpec((rank, tn2), lambda i, j, k: (0, j)),  # lora B2
            ],
            out_specs=pl.BlockSpec((tm_, tn2), lambda i, j, k: (i, j)),
            scratch_shapes=[pltpu.VMEM((tm_, tn2), jnp.float32),
                            pltpu.VMEM((tm_, rank), jnp.float32)],
        ),
        compiler_params=pltpu.CompilerParams(
            dimension_semantics=("parallel", "parallel", "arbitrary"),
            vmem_limit_bytes=vmem_limit_bytes),
    )(g, w2c, a2c, b2c)

    if Mp != M:
        out = out[:M]
    return out.reshape(B, S, D)


# --------------------------------- test harness ------------------------------

def init_params(key, d_model, ff_mult=3, lora_rank=32):
    """Synthetic params with the module's shapes; weights stored (in, out).
    LoRA B is given small nonzero values so the LoRA path is exercised
    (PyTorch inits it to zero)."""
    d_ff = d_model * ff_mult * 2
    inter = d_model * ff_mult
    ks = jax.random.split(key, 6)
    w1 = jax.random.normal(ks[0], (d_model, d_ff), jnp.float32) * 0.05
    a1 = jax.random.normal(ks[1], (d_model, lora_rank), jnp.float32) * 0.05
    b1 = jax.random.normal(ks[2], (lora_rank, d_ff), jnp.float32) * 0.05
    w2 = jax.random.normal(ks[3], (inter, d_model), jnp.float32) * 0.05
    a2 = jax.random.normal(ks[4], (inter, lora_rank), jnp.float32) * 0.05
    b2 = jax.random.normal(ks[5], (lora_rank, d_model), jnp.float32) * 0.05
    return (w1, a1, b1, w2, a2, b2)


def _reference(x, params, alpha=1.0):
    w1, a1, b1, w2, a2, b2 = params
    inter = w2.shape[0]
    h = x @ w1 + alpha * ((x @ a1) @ b1)
    x1, x2 = h[..., :inter], h[..., inter:]
    g = jax.nn.silu(x1) * x2
    return g @ w2 + alpha * ((g @ a2) @ b2)


if __name__ == "__main__":
    key = jax.random.PRNGKey(0)
    k_x, k_p = jax.random.split(key)

    batch, seq, d_model = 2, 8, 32
    x = jax.random.normal(k_x, (batch, seq, d_model), jnp.float32)
    params = init_params(k_p, d_model, ff_mult=3, lora_rank=32)
    ref = _reference(x, params, alpha=1.0)

    # f32 compute path: tight check against the f32 reference.
    out_f32 = jax.block_until_ready(
        feed_forward(x, params, alpha=1.0, compute_dtype=None))
    assert out_f32.shape == (batch, seq, d_model)
    assert jnp.allclose(out_f32, ref, atol=1e-4, rtol=1e-4)

    # Default bf16 fast path (f32 accumulation): looser tolerance.
    out_bf16 = jax.block_until_ready(feed_forward(x, params, alpha=1.0))
    assert out_bf16.shape == (batch, seq, d_model)
    assert jnp.allclose(out_bf16, ref, atol=1e-2, rtol=5e-2)

    # Token count not divisible by the tile: exercises the padding path.
    x2 = jax.random.normal(k_x, (2, 5, d_model), jnp.float32)
    out2 = jax.block_until_ready(feed_forward(x2, params, alpha=1.0))
    ref2 = _reference(x2, params, alpha=1.0)
    assert out2.shape == (2, 5, d_model)
    assert jnp.allclose(out2, ref2, atol=1e-2, rtol=5e-2)

    print("KERNEL_OK")
</pallas_src>

<mosaic_0001>
module attributes {stable_mosaic.version = 11 : i64} {
  func.func @_fc1_swiglu_kernel(%arg0: i32, %arg1: i32, %arg2: memref<16x32xf32, #tpu.memory_space<vmem>>, %arg3: memref<32x96xf32, #tpu.memory_space<vmem>>, %arg4: memref<32x96xf32, #tpu.memory_space<vmem>>, %arg5: memref<32x32xf32, #tpu.memory_space<vmem>>, %arg6: memref<32x96xf32, #tpu.memory_space<vmem>>, %arg7: memref<32x96xf32, #tpu.memory_space<vmem>>, %arg8: memref<16x96xf32, #tpu.memory_space<vmem>>) attributes {dimension_semantics = [#tpu.dimension_semantics<parallel>, #tpu.dimension_semantics<parallel>], iteration_bounds = array<i64: 1, 1>, scalar_prefetch = 0 : i64, scratch_operands = 0 : i64, tpu.core_type = #tpu.core_type<tc>, window_params = [{transform_indices = @transform_0, window_bounds = array<i64: 16, 32>}, {transform_indices = @transform_1, window_bounds = array<i64: 32, 96>}, {transform_indices = @transform_2, window_bounds = array<i64: 32, 96>}, {pipeline_mode = #tpu.pipeline_mode<synchronous>, transform_indices = @transform_3, window_bounds = array<i64: 32, 32>}, {transform_indices = @transform_4, window_bounds = array<i64: 32, 96>}, {transform_indices = @transform_5, window_bounds = array<i64: 32, 96>}, {transform_indices = @transform_6, window_bounds = array<i64: 16, 96>}]} {
    %c0 = arith.constant 0 : index
    %c0_0 = arith.constant 0 : index
    %0 = vector.load %arg2[%c0, %c0_0] : memref<16x32xf32, #tpu.memory_space<vmem>>, vector<16x32xf32>
    %c0_1 = arith.constant 0 : index
    %c0_2 = arith.constant 0 : index
    %1 = vector.load %arg5[%c0_1, %c0_2] : memref<32x32xf32, #tpu.memory_space<vmem>>, vector<32x32xf32>
    %cst = arith.constant dense<0.000000e+00> : vector<16x32xf32>
    %2 = tpu.matmul %0, %1, %cst {dimension_numbers = #tpu.dot_dimension_numbers<[1], [0], [0], [1], [0, 0, 1, 1], [], []>} : vector<16x32xf32>, vector<32x32xf32>, vector<16x32xf32> -> vector<16x32xf32>
    %cst_3 = arith.constant 1.000000e+00 : f32
    %3 = vector.broadcast %cst_3 : f32 to vector<16x32xf32>
    %4 = arith.mulf %3, %2 : vector<16x32xf32>
    %c0_4 = arith.constant 0 : index
    %c0_5 = arith.constant 0 : index
    %5 = vector.load %arg3[%c0_4, %c0_5] : memref<32x96xf32, #tpu.memory_space<vmem>>, vector<32x96xf32>
    %cst_6 = arith.constant dense<0.000000e+00> : vector<16x96xf32>
    %6 = tpu.matmul %0, %5, %cst_6 {dimension_numbers = #tpu.dot_dimension_numbers<[1], [0], [0], [1], [0, 0, 1, 1], [], []>} : vector<16x32xf32>, vector<32x96xf32>, vector<16x96xf32> -> vector<16x96xf32>
    %c0_7 = arith.constant 0 : index
    %c0_8 = arith.constant 0 : index
    %7 = vector.load %arg6[%c0_7, %c0_8] : memref<32x96xf32, #tpu.memory_space<vmem>>, vector<32x96xf32>
    %cst_9 = arith.constant dense<0.000000e+00> : vector<16x96xf32>
    %8 = tpu.matmul %4, %7, %cst_9 {dimension_numbers = #tpu.dot_dimension_numbers<[1], [0], [0], [1], [0, 0, 1, 1], [], []>} : vector<16x32xf32>, vector<32x96xf32>, vector<16x96xf32> -> vector<16x96xf32>
    %9 = arith.addf %6, %8 : vector<16x96xf32>
    %c0_10 = arith.constant 0 : index
    %c0_11 = arith.constant 0 : index
    %10 = vector.load %arg4[%c0_10, %c0_11] : memref<32x96xf32, #tpu.memory_space<vmem>>, vector<32x96xf32>
    %cst_12 = arith.constant dense<0.000000e+00> : vector<16x96xf32>
    %11 = tpu.matmul %0, %10, %cst_12 {dimension_numbers = #tpu.dot_dimension_numbers<[1], [0], [0], [1], [0, 0, 1, 1], [], []>} : vector<16x32xf32>, vector<32x96xf32>, vector<16x96xf32> -> vector<16x96xf32>
    %c0_13 = arith.constant 0 : index
    %c0_14 = arith.constant 0 : index
    %12 = vector.load %arg7[%c0_13, %c0_14] : memref<32x96xf32, #tpu.memory_space<vmem>>, vector<32x96xf32>
    %cst_15 = arith.constant dense<0.000000e+00> : vector<16x96xf32>
    %13 = tpu.matmul %4, %12, %cst_15 {dimension_numbers = #tpu.dot_dimension_numbers<[1], [0], [0], [1], [0, 0, 1, 1], [], []>} : vector<16x32xf32>, vector<32x96xf32>, vector<16x96xf32> -> vector<16x96xf32>
    %14 = arith.addf %11, %13 : vector<16x96xf32>
    %15 = arith.negf %9 : vector<16x96xf32>
    %16 = math.exp %15 : vector<16x96xf32>
    %cst_16 = arith.constant 1.000000e+00 : f32
    %17 = vector.broadcast %cst_16 : f32 to vector<16x96xf32>
    %18 = arith.addf %17, %16 : vector<16x96xf32>
    %19 = arith.divf %17, %18 : vector<16x96xf32>
    %20 = arith.mulf %9, %19 : vector<16x96xf32>
    %21 = arith.mulf %20, %14 : vector<16x96xf32>
    %c0_17 = arith.constant 0 : index
    %c0_18 = arith.constant 0 : index
    %22 = vector.load %arg8[%c0_17, %c0_18] : memref<16x96xf32, #tpu.memory_space<vmem>>, vector<16x96xf32>
    tpu.vector_store %arg8[%c0_17, %c0_18], %21 {strides = array<i32>} : memref<16x96xf32, #tpu.memory_space<vmem>>, vector<16x96xf32>,
    return
  }
  func.func @transform_0(%arg0: i32, %arg1: i32) -> (i32, i32) {
    %c0_i32 = arith.constant 0 : i32
    %c0_i32_0 = arith.constant 0 : i32
    return %arg0, %c0_i32 : i32, i32
  }
  func.func @transform_1(%arg0: i32, %arg1: i32) -> (i32, i32) {
    %c0_i32 = arith.constant 0 : i32
    %c0_i32_0 = arith.constant 0 : i32
    return %c0_i32, %arg1 : i32, i32
  }
  func.func @transform_2(%arg0: i32, %arg1: i32) -> (i32, i32) {
    %c0_i32 = arith.constant 0 : i32
    %c0_i32_0 = arith.constant 0 : i32
    return %c0_i32, %arg1 : i32, i32
  }
  func.func @transform_3(%arg0: i32, %arg1: i32) -> (i32, i32) {
    %c0_i32 = arith.constant 0 : i32
    %c0_i32_0 = arith.constant 0 : i32
    %c0_i32_1 = arith.constant 0 : i32
    return %c0_i32, %c0_i32_0 : i32, i32
  }
  func.func @transform_4(%arg0: i32, %arg1: i32) -> (i32, i32) {
    %c0_i32 = arith.constant 0 : i32
    %c0_i32_0 = arith.constant 0 : i32
    return %c0_i32, %arg1 : i32, i32
  }
  func.func @transform_5(%arg0: i32, %arg1: i32) -> (i32, i32) {
    %c0_i32 = arith.constant 0 : i32
    %c0_i32_0 = arith.constant 0 : i32
    return %c0_i32, %arg1 : i32, i32
  }
  func.func @transform_6(%arg0: i32, %arg1: i32) -> (i32, i32) {
    %c0_i32 = arith.constant 0 : i32
    return %arg0, %arg1 : i32, i32
  }
}

</mosaic_0001>

<llo_original>
// kernel: tpu_custom_call.1
$region0: #{tpu_custom_call.1}
  #allocation0 [shape = 'u32[]', space=smem, size = 0x4, offset = 0x4, fixed_abs, tag = 'smem constant byte address 0x4 - core index']
  #allocation1 [shape = 'u32[72,128]{1,0:T(1,128)}', space=vmem, size = 0x9000, scoped, tag = 'internal scratch']
  %s0 = inlined_call_operand.hbm [shape: f32[16,32], index: 0, kind: input, shape index: {}]
  %s1 = inlined_call_operand.hbm [shape: f32[32,96], index: 1, kind: input, shape index: {}]
  %s2 = inlined_call_operand.hbm [shape: f32[32,96], index: 2, kind: input, shape index: {}]
  %s3 = inlined_call_operand.hbm [shape: f32[32,32], index: 3, kind: input, shape index: {}]
  %s4 = inlined_call_operand.hbm [shape: f32[32,96], index: 4, kind: input, shape index: {}]
  %s5 = inlined_call_operand.hbm [shape: f32[32,96], index: 5, kind: input, shape index: {}]
  %s6 = inlined_call_operand.hbm [shape: f32[16,96], index: 6, kind: output, shape index: {}]
  %s7 = sld [smem:[#allocation0]]
  $region58: #{tpu_custom_call.1} parent=0
    _
  %s9 = ssub.s32 1, %s7
  %s10 = scalar_select 0, %s9, %s7
  $region1: #{tpu_custom_call.1} parent=0
    #allocation2 [shape = 'u8[8192]{0}', space=vmem, size = 0x2000, scoped, tag = 'input window, operand 0, single buffered']
    #allocation3 [shape = 's32[1]{0}', space=sflag, size = 0x4, scoped, tag = 'scoped memory for tpu_custom_call.1']
    #allocation4 [shape = 's32[1]{0}', space=sflag, size = 0x4, scoped, tag = 'scoped memory for tpu_custom_call.1']
    #allocation5 [shape = 'u8[16384]{0}', space=vmem, size = 0x4000, scoped, tag = 'input window, operand 1, single buffered']
    #allocation6 [shape = 's32[1]{0}', space=sflag, size = 0x4, scoped, tag = 'scoped memory for tpu_custom_call.1']
    #allocation7 [shape = 'u8[16384]{0}', space=vmem, size = 0x4000, scoped, tag = 'input window, operand 2, single buffered']
    #allocation8 [shape = 'u8[16384]{0}', space=vmem, size = 0x4000, scoped, tag = 'input window, operand 3, single buffered']
    #allocation9 [shape = 's32[1]{0}', space=sflag, size = 0x4, scoped, tag = 'scoped memory for tpu_custom_call.1']
    #allocation10 [shape = 'u8[16384]{0}', space=vmem, size = 0x4000, scoped, tag = 'input window, operand 4, single buffered']
    #allocation11 [shape = 'u8[16384]{0}', space=vmem, size = 0x4000, scoped, tag = 'input window, operand 5, single buffered']
    #allocation12 [shape = 's32[1]{0}', space=sflag, size = 0x4, scoped, tag = 'scoped memory for tpu_custom_call.1']
    #allocation13 [shape = 'u8[8192]{0}', space=vmem, size = 0x2000, scoped, tag = 'output window, operand 0, single buffered']
    %11 = vsyncpa [#allocation3], 0
    %12 = vsyncpa [#allocation6], 0
    %13 = vsyncpa [#allocation9], 0
    %14 = vsyncpa [#allocation12], 0
    %15 = vsyncpa [#allocation4], 0
    // Predicated region
    $region2: #{tpu_custom_call.1} parent=1 // pred_check
      _
    $region3: #{tpu_custom_call.1} parent=1 // pred_check_branch
      %17 = sbr.rel (0) target = $region5
    $region4: #{tpu_custom_call.1} parent=1 // pred_region
      %19 = vsyncadd [#allocation3], 0
      %s20 = sshll.u32 %s0, 4
      %s21 = int_to_ptr.hbm [resolvable:$true] %s20
      %s22 = sshll.u32 [#allocation2], 4
      %s23 = int_to_ptr.vmem [resolvable:$true] %s22
      %28 = dma.hbm_to_vmem [thread:$0]  %s21, 256, %s23, [#allocation3], 128, 128, 8
    $region5: #{tpu_custom_call.1} parent=1 // pred_fallthru
      _
    // Predicated region
    $region6: #{tpu_custom_call.1} parent=1 // pred_check
      _
    $region7: #{tpu_custom_call.1} parent=1 // pred_check_branch
      %30 = sbr.rel (0) target = $region9
    $region8: #{tpu_custom_call.1} parent=1 // pred_region
      %32 = vsyncadd [#allocation6], 0
      %s33 = sshll.u32 %s1, 4
      %s34 = int_to_ptr.hbm [resolvable:$true] %s33
      %s35 = sshll.u32 [#allocation5], 4
      %s36 = int_to_ptr.vmem [resolvable:$true] %s35
      %41 = dma.hbm_to_vmem [thread:$0]  %s34, 512, %s36, [#allocation6], 128, 128, 8
    $region9: #{tpu_custom_call.1} parent=1 // pred_fallthru
      _
    // Predicated region
    $region10: #{tpu_custom_call.1} parent=1 // pred_check
      _
    $region11: #{tpu_custom_call.1} parent=1 // pred_check_branch
      %43 = sbr.rel (0) target = $region13
    $region12: #{tpu_custom_call.1} parent=1 // pred_region
      %45 = vsyncadd [#allocation6], 0
      %s46 = sshll.u32 %s2, 4
      %s47 = int_to_ptr.hbm [resolvable:$true] %s46
      %s48 = sshll.u32 [#allocation7], 4
      %s49 = int_to_ptr.vmem [resolvable:$true] %s48
      %54 = dma.hbm_to_vmem [thread:$0]  %s47, 512, %s49, [#allocation6], 128, 128, 8
    $region13: #{tpu_custom_call.1} parent=1 // pred_fallthru
      _
    // Predicated region
    $region14: #{tpu_custom_call.1} parent=1 // pred_check
      _
    $region15: #{tpu_custom_call.1} parent=1 // pred_check_branch
      %56 = sbr.rel (0) target = $region17
    $region16: #{tpu_custom_call.1} parent=1 // pred_region
      %58 = vsyncadd [#allocation9], 0
      %s59 = sshll.u32 %s3, 4
      %s60 = int_to_ptr.hbm [resolvable:$true] %s59
      %s61 = sshll.u32 [#allocation8], 4
      %s62 = int_to_ptr.vmem [resolvable:$true] %s61
      %67 = dma.hbm_to_vmem [thread:$0]  %s60, 512, %s62, [#allocation9], 128, 128, 8
    $region17: #{tpu_custom_call.1} parent=1 // pred_fallthru
      _
    // Predicated region
    $region18: #{tpu_custom_call.1} parent=1 // pred_check
      _
    $region19: #{tpu_custom_call.1} parent=1 // pred_check_branch
      %69 = sbr.rel (0) target = $region21
    $region20: #{tpu_custom_call.1} parent=1 // pred_region
      %71 = vsyncadd [#allocation9], 0
      %s72 = sshll.u32 %s4, 4
      %s73 = int_to_ptr.hbm [resolvable:$true] %s72
      %s74 = sshll.u32 [#allocation10], 4
      %s75 = int_to_ptr.vmem [resolvable:$true] %s74
      %80 = dma.hbm_to_vmem [thread:$0]  %s73, 512, %s75, [#allocation9], 128, 128, 8
    $region21: #{tpu_custom_call.1} parent=1 // pred_fallthru
      _
    // Predicated region
    $region22: #{tpu_custom_call.1} parent=1 // pred_check
      _
    $region23: #{tpu_custom_call.1} parent=1 // pred_check_branch
      %82 = sbr.rel (0) target = $region25
    $region24: #{tpu_custom_call.1} parent=1 // pred_region
      %84 = vsyncadd [#allocation12], 0
      %s85 = sshll.u32 %s5, 4
      %s86 = int_to_ptr.hbm [resolvable:$true] %s85
      %s87 = sshll.u32 [#allocation11], 4
      %s88 = int_to_ptr.vmem [resolvable:$true] %s87
      %93 = dma.hbm_to_vmem [thread:$0]  %s86, 512, %s88, [#allocation12], 128, 128, 8
    $region25: #{tpu_custom_call.1} parent=1 // pred_fallthru
      _
    // Predicated region
    $region26: #{tpu_custom_call.1} parent=1 // pred_check
      _
    $region27: #{tpu_custom_call.1} parent=1 // pred_check_branch
      %95 = sbr.rel (0) target = $region29
    $region28: #{tpu_custom_call.1} parent=1 // pred_region
      %97 = dma.done [#allocation3], 256
    $region29: #{tpu_custom_call.1} parent=1 // pred_fallthru
      _
    // Predicated region
    $region30: #{tpu_custom_call.1} parent=1 // pred_check
      _
    $region31: #{tpu_custom_call.1} parent=1 // pred_check_branch
      %99 = sbr.rel (0) target = $region33
    $region32: #{tpu_custom_call.1} parent=1 // pred_region
      %101 = dma.done [#allocation6], 512
    $region33: #{tpu_custom_call.1} parent=1 // pred_fallthru
      _
    // Predicated region
    $region34: #{tpu_custom_call.1} parent=1 // pred_check
      _
    $region35: #{tpu_custom_call.1} parent=1 // pred_check_branch
      %103 = sbr.rel (0) target = $region37
    $region36: #{tpu_custom_call.1} parent=1 // pred_region
      %105 = dma.done [#allocation6], 512
    $region37: #{tpu_custom_call.1} parent=1 // pred_fallthru
      _
    // Predicated region
    $region38: #{tpu_custom_call.1} parent=1 // pred_check
      _
    $region39: #{tpu_custom_call.1} parent=1 // pred_check_branch
      %107 = sbr.rel (0) target = $region41
    $region40: #{tpu_custom_call.1} parent=1 // pred_region
      %109 = dma.done [#allocation9], 512
    $region41: #{tpu_custom_call.1} parent=1 // pred_fallthru
      _
    // Predicated region
    $region42: #{tpu_custom_call.1} parent=1 // pred_check
      _
    $region43: #{tpu_custom_call.1} parent=1 // pred_check_branch
      %111 = sbr.rel (0) target = $region45
    $region44: #{tpu_custom_call.1} parent=1 // pred_region
      %113 = dma.done [#allocation9], 512
    $region45: #{tpu_custom_call.1} parent=1 // pred_fallthru
      _
    // Predicated region
    $region46: #{tpu_custom_call.1} parent=1 // pred_check
      _
    $region47: #{tpu_custom_call.1} parent=1 // pred_check_branch
      %115 = sbr.rel (0) target = $region49
    $region48: #{tpu_custom_call.1} parent=1 // pred_region
      %117 = dma.done [#allocation12], 512
    $region49: #{tpu_custom_call.1} parent=1 // pred_fallthru
      _
    %v118 = vld [vmem:[#allocation2] sm:$0xff]
    %v119 = vld [vmem:[#allocation2 + $0x8] sm:$0xff]
    %v120 = vld [vmem:[#allocation8] sm:$0xff]
    %v121 = vld [vmem:[#allocation8 + $0x8] sm:$0xff]
    %v122 = vld [vmem:[#allocation8 + $0x10] sm:$0xff]
    %v123 = vld [vmem:[#allocation8 + $0x18] sm:$0xff]
    %vm124 = vcmask 261120
    %v126 = vsel %vm124, %v118, 0
    %v129 = vsel %vm124, %v119, 0
    %131 = vmatpush.msra.mxu0 0.0
    %132 = vmatpush.msra.mxu0 0.0
    %133 = vmatpush.msra.mxu0 0.0
    %134 = vmatpush.msra.mxu0 0.0
    %135 = vmatpush.msra.mxu0 0.0
    %136 = vmatpush.msra.mxu0 0.0
    %137 = vmatpush.msra.mxu0 0.0
    %138 = vmatpush.msra.mxu0 0.0
    %139 = vmatpush.msra.mxu0 0.0
    %140 = vmatpush.msra.mxu0 0.0
    %141 = vmatpush.msra.mxu0 0.0
    %142 = vmatpush.msra.mxu0 0.0
    %143 = vmatpush.msra.mxu0 %v123
    %144 = vmatpush.msra.mxu0 %v122
    %145 = vmatpush.msra.mxu0 %v121
    %146 = vmatpush.msra.mxu0 %v120
    %147 = vmatmul.f32.gmra.mxu0 %v126
    %v148 = vpop.f32.mrf.mxu0
    %v149 = vadd.f32 0.0, %v148
    %150 = vmatmul.f32.gmra.mxu0 %v129
    %v151 = vpop.f32.mrf.mxu0
    %v152 = vadd.f32 0.0, %v151
    %153 = vdwg.mxu0
    %v154 = vld [vmem:[#allocation5] sm:$0xff]
    %v155 = vld [vmem:[#allocation5 + $0x8] sm:$0xff]
    %v156 = vld [vmem:[#allocation5 + $0x10] sm:$0xff]
    %v157 = vld [vmem:[#allocation5 + $0x18] sm:$0xff]
    %v158 = vld [vmem:[#allocation10] sm:$0xff]
    %v159 = vld [vmem:[#allocation10 + $0x8] sm:$0xff]
    %v160 = vld [vmem:[#allocation10 + $0x10] sm:$0xff]
    %v161 = vld [vmem:[#allocation10 + $0x18] sm:$0xff]
    %v163 = vsel %vm124, %v149, 0
    %v166 = vsel %vm124, %v152, 0
    %168 = vmatpush.msra.mxu0 0.0
    %169 = vmatpush.msra.mxu0 0.0
    %170 = vmatpush.msra.mxu0 0.0
    %171 = vmatpush.msra.mxu0 0.0
    %172 = vmatpush.msra.mxu0 0.0
    %173 = vmatpush.msra.mxu0 0.0
    %174 = vmatpush.msra.mxu0 0.0
    %175 = vmatpush.msra.mxu0 0.0
    %176 = vmatpush.msra.mxu0 0.0
    %177 = vmatpush.msra.mxu0 0.0
    %178 = vmatpush.msra.mxu0 0.0
    %179 = vmatpush.msra.mxu0 0.0
    %180 = vmatpush.msra.mxu0 %v161
    %181 = vmatpush.msra.mxu0 %v160
    %182 = vmatpush.msra.mxu0 %v159
    %183 = vmatpush.msra.mxu0 %v158
    %184 = vmatmul.f32.gmra.mxu0 %v163
    %v185 = vpop.f32.mrf.mxu0
    %v186 = vadd.f32 0.0, %v185
    %187 = vmatmul.f32.gmra.mxu0 %v166
    %v188 = vpop.f32.mrf.mxu0
    %v189 = vadd.f32 0.0, %v188
    %190 = vdwg.mxu0
    %191 = vmatpush.msra.mxu0 0.0
    %192 = vmatpush.msra.mxu0 0.0
    %193 = vmatpush.msra.mxu0 0.0
    %194 = vmatpush.msra.mxu0 0.0
    %195 = vmatpush.msra.mxu0 0.0
    %196 = vmatpush.msra.mxu0 0.0
    %197 = vmatpush.msra.mxu0 0.0
    %198 = vmatpush.msra.mxu0 0.0
    %199 = vmatpush.msra.mxu0 0.0
    %200 = vmatpush.msra.mxu0 0.0
    %201 = vmatpush.msra.mxu0 0.0
    %202 = vmatpush.msra.mxu0 0.0
    %203 = vmatpush.msra.mxu0 %v157
    %204 = vmatpush.msra.mxu0 %v156
    %205 = vmatpush.msra.mxu0 %v155
    %206 = vmatpush.msra.mxu0 %v154
    %207 = vmatmul.f32.gmra.mxu0 %v126
    %v208 = vpop.f32.mrf.mxu0
    %v209 = vadd.f32 %v186, %v208
    %210 = vmatmul.f32.gmra.mxu0 %v129
    %v211 = vpop.f32.mrf.mxu0
    %v212 = vadd.f32 %v189, %v211
    %213 = vdwg.mxu0
    %v214 = vld [vmem:[#allocation7] sm:$0xff]
    %v215 = vld [vmem:[#allocation7 + $0x8] sm:$0xff]
    %v216 = vld [vmem:[#allocation7 + $0x10] sm:$0xff]
    %v217 = vld [vmem:[#allocation7 + $0x18] sm:$0xff]
    %v218 = vld [vmem:[#allocation11] sm:$0xff]
    %v219 = vld [vmem:[#allocation11 + $0x8] sm:$0xff]
    %v220 = vld [vmem:[#allocation11 + $0x10] sm:$0xff]
    %v221 = vld [vmem:[#allocation11 + $0x18] sm:$0xff]
    %222 = vmatpush.msra.mxu0 0.0
    %223 = vmatpush.msra.mxu0 0.0
    %224 = vmatpush.msra.mxu0 0.0
    %225 = vmatpush.msra.mxu0 0.0
    %226 = vmatpush.msra.mxu0 0.0
    %227 = vmatpush.msra.mxu0 0.0
    %228 = vmatpush.msra.mxu0 0.0
    %229 = vmatpush.msra.mxu0 0.0
    %230 = vmatpush.msra.mxu0 0.0
    %231 = vmatpush.msra.mxu0 0.0
    %232 = vmatpush.msra.mxu0 0.0
    %233 = vmatpush.msra.mxu0 0.0
    %234 = vmatpush.msra.mxu0 %v221
    %235 = vmatpush.msra.mxu0 %v220
    %236 = vmatpush.msra.mxu0 %v219
    %237 = vmatpush.msra.mxu0 %v218
    %238 = vmatmul.f32.gmra.mxu0 %v163
    %v239 = vpop.f32.mrf.mxu0
    %v240 = vadd.f32 0.0, %v239
    %241 = vmatmul.f32.gmra.mxu0 %v166
    %v242 = vpop.f32.mrf.mxu0
    %v243 = vadd.f32 0.0, %v242
    %244 = vdwg.mxu0
    %245 = vmatpush.msra.mxu0 0.0
    %246 = vmatpush.msra.mxu0 0.0
    %247 = vmatpush.msra.mxu0 0.0
    %248 = vmatpush.msra.mxu0 0.0
    %249 = vmatpush.msra.mxu0 0.0
    %250 = vmatpush.msra.mxu0 0.0
    %251 = vmatpush.msra.mxu0 0.0
    %252 = vmatpush.msra.mxu0 0.0
    %253 = vmatpush.msra.mxu0 0.0
    %254 = vmatpush.msra.mxu0 0.0
    %255 = vmatpush.msra.mxu0 0.0
    %256 = vmatpush.msra.mxu0 0.0
    %257 = vmatpush.msra.mxu0 %v217
    %258 = vmatpush.msra.mxu0 %v216
    %259 = vmatpush.msra.mxu0 %v215
    %260 = vmatpush.msra.mxu0 %v214
    %261 = vmatmul.f32.gmra.mxu0 %v126
    %v262 = vpop.f32.mrf.mxu0
    %v263 = vadd.f32 %v240, %v262
    %264 = vmatmul.f32.gmra.mxu0 %v129
    %v265 = vpop.f32.mrf.mxu0
    %v266 = vadd.f32 %v243, %v265
    %267 = vdwg.mxu0
    %v268 = vxor.u32 %v209, 2147483648
    %v269 = vxor.u32 %v212, 2147483648
    %v270 = vmul.f32 %v268, 1.442695
    %v271 = vpow.pop %v270
    %v272 = vmul.f32 %v269, 1.442695
    %v273 = vpow.pop %v272
    %v274 = vadd.f32 %v271, 1.0
    %v275 = vadd.f32 %v273, 1.0
    %v276 = vrcp.pop %v274
    %v277 = vmul.f32 %v274, %v276
    %v278 = vsub.f32 1.0, %v277
    %v279 = vmul.f32 %v276, %v278
    %v280 = vadd.f32 %v276, %v279
    %vm281 = vweird.f32 %v274
    %vm282 = vweird.f32 %v276
    %vm283 = vmor %vm281, %vm282
    %v284 = vsel %vm283, %v276, %v280
    %v285 = vand.u32 2147483647, %v274
    %vm286 = vcmp.eq.f32.partialorder %v285, 8.507059e+37
    %v287 = vand.u32 %v274, 2147483648
    %v288 = vor.u32 1.1754944e-38, %v287
    %v289 = vsel %vm286, %v288, %v284
    %v290 = vmul.f32 1.0, %v289
    %v291 = vrcp.pop %v275
    %v292 = vmul.f32 %v275, %v291
    %v293 = vsub.f32 1.0, %v292
    %v294 = vmul.f32 %v291, %v293
    %v295 = vadd.f32 %v291, %v294
    %vm296 = vweird.f32 %v275
    %vm297 = vweird.f32 %v291
    %vm298 = vmor %vm296, %vm297
    %v299 = vsel %vm298, %v291, %v295
    %v300 = vand.u32 2147483647, %v275
    %vm301 = vcmp.eq.f32.partialorder %v300, 8.507059e+37
    %v302 = vand.u32 %v275, 2147483648
    %v303 = vor.u32 1.1754944e-38, %v302
    %v304 = vsel %vm301, %v303, %v299
    %v305 = vmul.f32 1.0, %v304
    %v306 = vmul.f32 %v209, %v290
    %v307 = vmul.f32 %v212, %v305
    %v308 = vmul.f32 %v306, %v263
    %v309 = vmul.f32 %v307, %v266
    %vm310 = vcmask 785408
    %311 = vst.msk [vmem:[#allocation13] sm:$0xff] %vm310, %v308
    %312 = vst.msk [vmem:[#allocation13 + $0x8] sm:$0xff] %vm310, %v309
    // Predicated region
    $region50: #{tpu_custom_call.1} parent=1 // pred_check
      _
    $region51: #{tpu_custom_call.1} parent=1 // pred_check_branch
      %314 = sbr.rel (0) target = $region53
    $region52: #{tpu_custom_call.1} parent=1 // pred_region
      %316 = vsyncadd [#allocation4], 0
      %s317 = sshll.u32 [#allocation13], 4
      %s318 = int_to_ptr.vmem [resolvable:$true] %s317
      %s319 = sshll.u32 %s6, 4
      %s320 = int_to_ptr.hbm [resolvable:$true] %s319
      %325 = dma.vmem_to_hbm [thread:$0]  %s318, 256, %s320, [#allocation4], 128, 128, 8
    $region53: #{tpu_custom_call.1} parent=1 // pred_fallthru
      _
    // Predicated region
    $region54: #{tpu_custom_call.1} parent=1 // pred_check
      _
    $region55: #{tpu_custom_call.1} parent=1 // pred_check_branch
      %327 = sbr.rel (0) target = $region57
    $region56: #{tpu_custom_call.1} parent=1 // pred_region
      %329 = dma.done [#allocation4], 256
    $region57: #{tpu_custom_call.1} parent=1 // pred_fallthru
      _
    %330 = vsyncpa [#allocation3], 1
    %331 = vsyncpa [#allocation6], 1
    %332 = vsyncpa [#allocation9], 1
    %333 = vsyncpa [#allocation12], 1
    %334 = vsyncpa [#allocation4], 1

</llo_original>
